<compile_context>
chip_gen: v7x
topology: tpu7x:2x2x1
jax: 0.10.0
libtpu: 0.0.40
codegen_flags: <defaults>
</compile_context>

<pallas_src>
import functools
import re

import jax
import jax.numpy as jnp
from jax.experimental import pallas as pl
from jax.experimental.pallas import tpu as pltpu

F_DIM = 32
EPS = 1e-5


def _round_up(x, m):
    return (x + m - 1) // m * m


def _cdiv(a, b):
    return (a + b - 1) // b


def _tpu_generation():
    """Best-effort TPU generation (5, 6, 7, ...); None if unknown."""
    try:
        kind = jax.devices()[0].device_kind
    except Exception:
        return None
    m = re.search(r"(\d+)", kind)
    return int(m.group(1)) if m else None


def _resnet_kernel(samp_ref, aff_ref, w_ref, out_ref, *, mxu_dtype):
    """One (1, TM, LANES) lane-packed row tile.

    samp_ref : (1, TM, LANES)    packed sample rows (LANES = PACK * F), f32
    aff_ref  : (1, 5, LANES)     per-batch slab: scale1, shift1, scale2,
                                 shift2 (fc1 bias folded in), fc2 bias, f32
    w_ref    : (2, LANES, LANES) block-diag fc1/fc2 weights, (in, out), mxu_dtype
    out_ref  : (1, TM, LANES)    f32
    """
    # Read affine rows straight from the ref (cheap broadcast operands).
    scale1 = aff_ref[0, 0:1, :]
    shift1 = aff_ref[0, 1:2, :]
    scale2 = aff_ref[0, 2:3, :]
    shift2 = aff_ref[0, 3:4, :]
    bias2 = aff_ref[0, 4:5, :]

    # ---- bn1 (eval-mode stats folded into scale/shift) -> relu -> fc1 ----
    h = jnp.maximum(scale1 * samp_ref[0] + shift1, 0.0)
    h = jnp.dot(h.astype(mxu_dtype), w_ref[0],
                preferred_element_type=jnp.float32)

    # ---- bn2 (fc1 bias folded into shift2) -> relu -> fc2 ----
    h = jnp.maximum(scale2 * h + shift2, 0.0)
    h = jnp.dot(h.astype(mxu_dtype), w_ref[1],
                preferred_element_type=jnp.float32) + bias2

    # ---- residual add: recompute bn1 output, single lane-dense store ----
    out_ref[0] = scale1 * samp_ref[0] + shift1 + h


def batched_occnet_resnet_layer(shape_embedding, sample_embeddings, params,
                                running_stats=None, *, row_tile=None,
                                lanes=None, mxu_dtype=jnp.float32):
    """shape_embedding: (B, F) f32; sample_embeddings: (B, S, F) f32 -> (B, S, F)."""
    B, F = shape_embedding.shape
    _, S, _ = sample_embeddings.shape

    if running_stats is None:
        # Fresh-module eval-mode buffers (scalar buffers in the PyTorch module).
        running_stats = {"bn1_mean": 0.0, "bn1_var": 1.0,
                         "bn2_mean": 0.0, "bn2_var": 1.0}

    gen = _tpu_generation()

    # --- lane packing width: 256 on v6e/v7x (256-wide MXU), 128 otherwise ---
    if lanes is None:
        target = 256 if (gen is not None and gen >= 6) else 128
        if F <= target and target % F == 0:
            lanes = target
        elif F <= 128 and 128 % F == 0:
            lanes = 128
        else:
            lanes = F
    PACK = lanes // F
    LANES = lanes

    # --- row tile: big tiles amortize per-step overhead; v7x gets the biggest ---
    if row_tile is None:
        row_tile = 4096 if (gen is not None and gen >= 7) else 2048

    # --- conditional-BN affine params: 4 tiny (B,F)@(F,F) matmuls in plain XLA ---
    def linear(x, w, b):
        return x @ w.T + b

    beta1 = linear(shape_embedding, params["bn1_fc_beta_w"], params["bn1_fc_beta_b"])
    gamma1 = linear(shape_embedding, params["bn1_fc_gamma_w"], params["bn1_fc_gamma_b"])
    beta2 = linear(shape_embedding, params["bn2_fc_beta_w"], params["bn2_fc_beta_b"])
    gamma2 = linear(shape_embedding, params["bn2_fc_gamma_w"], params["bn2_fc_gamma_b"])

    # --- fold eval-mode (scalar) running stats into per-batch scale/shift ---
    inv1 = 1.0 / jnp.sqrt(running_stats["bn1_var"] + EPS)
    inv2 = 1.0 / jnp.sqrt(running_stats["bn2_var"] + EPS)
    scale1 = gamma1 * inv1
    shift1 = beta1 - gamma1 * running_stats["bn1_mean"] * inv1
    scale2 = gamma2 * inv2
    # fc1 bias feeds bn2 directly -> fold it into bn2's shift.
    shift2 = scale2 * params["fc1_b"] + beta2 - gamma2 * running_stats["bn2_mean"] * inv2

    def tile_feat(v):  # (..., F) -> (..., LANES), pattern [v|v|...|v]
        return jnp.tile(v, (1,) * (v.ndim - 1) + (PACK,))

    bias2 = jnp.broadcast_to(jnp.tile(params["fc2_b"], PACK)[None, :], (B, LANES))
    affine = jnp.stack(
        [tile_feat(scale1), tile_feat(shift1), tile_feat(scale2), tile_feat(shift2),
         bias2], axis=1).astype(jnp.float32)                        # (B, 5, LANES)

    # Block-diagonal (in, out) weights: one LANES-wide matmul applies fc per group.
    eye = jnp.eye(PACK, dtype=jnp.float32)
    w1bd = jnp.kron(eye, params["fc1_w"].T.astype(jnp.float32))     # (LANES, LANES)
    w2bd = jnp.kron(eye, params["fc2_w"].T.astype(jnp.float32))
    w_all = jnp.stack([w1bd, w2bd], axis=0).astype(mxu_dtype)       # (2, LANES, LANES)

    # --- pack sample rows; pad only to (8 * PACK) granularity, cdiv row grid ---
    rows = _cdiv(S, PACK)
    rows8 = _round_up(rows, 8)
    S_pad = rows8 * PACK

    TM = min(row_tile, rows8)
    # Megacore guard: keep >= 2 total grid steps when there is enough work.
    if B * _cdiv(rows8, TM) < 2 and rows8 > 8:
        TM = _round_up(_cdiv(rows8, 2), 8)
    grid = (B, _cdiv(rows8, TM))

    x = sample_embeddings.astype(jnp.float32)
    if S_pad != S:
        x = jnp.pad(x, ((0, 0), (0, S_pad - S), (0, 0)))
    x_packed = x.reshape(B, rows8, LANES)

    kernel = functools.partial(_resnet_kernel, mxu_dtype=mxu_dtype)

    fn = pl.pallas_call(
        kernel,
        out_shape=jax.ShapeDtypeStruct((B, rows8, LANES), jnp.float32),
        grid_spec=pltpu.PrefetchScalarGridSpec(
            num_scalar_prefetch=0,
            grid=grid,
            in_specs=[
                pl.BlockSpec((1, TM, LANES), lambda b, t: (b, t, 0)),      # samples
                pl.BlockSpec((1, 5, LANES), lambda b, t: (b, 0, 0)),       # affine slab
                pl.BlockSpec((2, LANES, LANES), lambda b, t: (0, 0, 0)),   # weight slab
            ],
            out_specs=pl.BlockSpec((1, TM, LANES), lambda b, t: (b, t, 0)),
        ),
        compiler_params=pltpu.CompilerParams(
            dimension_semantics=("parallel", "parallel")),
        # Working set stays well under the default scoped VMEM limit:
        #   <= 2*2*TM*LANES*4B (in+out, double-buffered) + ~1 MiB weights.
    )
    out_packed = fn(x_packed, affine, w_all)
    out = out_packed.reshape(B, S_pad, F)[:, :S, :]
    return out


def _reference(shape_embedding, sample_embeddings, params):
    """Pure-JAX reference mirroring the PyTorch eval-mode forward."""
    def linear(x, w, b):
        return x @ w.T + b

    def cbn(shape_e, x, wb, bb, wg, bg):
        beta = linear(shape_e, wb, bb)
        gamma = linear(shape_e, wg, bg)
        xn = (x - 0.0) / jnp.sqrt(1.0 + EPS)
        return gamma[:, None, :] * xn + beta[:, None, :]

    x = cbn(shape_embedding, sample_embeddings,
            params["bn1_fc_beta_w"], params["bn1_fc_beta_b"],
            params["bn1_fc_gamma_w"], params["bn1_fc_gamma_b"])
    init = x
    x = jnp.maximum(x, 0.0)
    x = linear(x, params["fc1_w"], params["fc1_b"])
    x = cbn(shape_embedding, x,
            params["bn2_fc_beta_w"], params["bn2_fc_beta_b"],
            params["bn2_fc_gamma_w"], params["bn2_fc_gamma_b"])
    x = jnp.maximum(x, 0.0)
    x = linear(x, params["fc2_w"], params["fc2_b"])
    return init + x


def _init_params(key, f_dim):
    names = ["bn1_fc_beta", "bn1_fc_gamma", "fc1", "bn2_fc_beta", "bn2_fc_gamma", "fc2"]
    params = {}
    keys = jax.random.split(key, 2 * len(names))
    scale = 1.0 / jnp.sqrt(f_dim)
    for i, n in enumerate(names):
        params[n + "_w"] = jax.random.uniform(
            keys[2 * i], (f_dim, f_dim), jnp.float32, -scale, scale)
        params[n + "_b"] = jax.random.uniform(
            keys[2 * i + 1], (f_dim,), jnp.float32, -scale, scale)
    return params


if __name__ == "__main__":
    key = jax.random.PRNGKey(0)
    k_shape, k_samp, k_params = jax.random.split(key, 3)

    B, S, F = 2, 8, F_DIM
    shape_embedding = jax.random.normal(k_shape, (B, F), jnp.float32)
    sample_embeddings = jax.random.normal(k_samp, (B, S, F), jnp.float32)
    params = _init_params(k_params, F)

    ref = _reference(shape_embedding, sample_embeddings, params)

    # Default f32-MXU path: matches the eval-mode PyTorch forward to 1e-4.
    out = batched_occnet_resnet_layer(shape_embedding, sample_embeddings, params)
    out = jax.block_until_ready(out)
    assert out.shape == (B, S, F)
    assert jnp.allclose(out, ref, atol=1e-4, rtol=1e-4), float(jnp.max(jnp.abs(out - ref)))

    # bf16-MXU-operand path (perf-review recommendation); bf16-level tolerance.
    out_bf16 = batched_occnet_resnet_layer(
        shape_embedding, sample_embeddings, params, mxu_dtype=jnp.bfloat16)
    out_bf16 = jax.block_until_ready(out_bf16)
    assert out_bf16.shape == (B, S, F)
    assert jnp.allclose(out_bf16, ref, atol=5e-2, rtol=5e-2), \
        float(jnp.max(jnp.abs(out_bf16 - ref)))

    print("KERNEL_OK")
</pallas_src>

<mosaic_0001>
module attributes {stable_mosaic.version = 11 : i64} {
  func.func @_resnet_kernel(%arg0: i32, %arg1: i32, %arg2: memref<1x8x128xf32, #tpu.memory_space<vmem>>, %arg3: memref<1x5x128xf32, #tpu.memory_space<vmem>>, %arg4: memref<2x128x128xf32, #tpu.memory_space<vmem>>, %arg5: memref<1x8x128xf32, #tpu.memory_space<vmem>>) attributes {dimension_semantics = [#tpu.dimension_semantics<parallel>, #tpu.dimension_semantics<parallel>], iteration_bounds = array<i64: 2, 1>, scalar_prefetch = 0 : i64, scratch_operands = 0 : i64, tpu.core_type = #tpu.core_type<tc>, window_params = [{transform_indices = @transform_0, window_bounds = array<i64: 1, 8, 128>}, {transform_indices = @transform_1, window_bounds = array<i64: 1, 5, 128>}, {pipeline_mode = #tpu.pipeline_mode<synchronous>, transform_indices = @transform_2, window_bounds = array<i64: 2, 128, 128>}, {transform_indices = @transform_3, window_bounds = array<i64: 1, 8, 128>}]} {
    %c0 = arith.constant 0 : index
    %c0_0 = arith.constant 0 : index
    %c0_1 = arith.constant 0 : index
    %0 = vector.load %arg3[%c0, %c0_0, %c0_1] : memref<1x5x128xf32, #tpu.memory_space<vmem>>, vector<1x1x128xf32>
    %1 = vector.shape_cast %0 : vector<1x1x128xf32> to vector<1x128xf32>
    %c0_2 = arith.constant 0 : index
    %c1 = arith.constant 1 : index
    %c0_3 = arith.constant 0 : index
    %2 = vector.load %arg3[%c0_2, %c1, %c0_3] : memref<1x5x128xf32, #tpu.memory_space<vmem>>, vector<1x1x128xf32>
    %3 = vector.shape_cast %2 : vector<1x1x128xf32> to vector<1x128xf32>
    %c0_4 = arith.constant 0 : index
    %c2 = arith.constant 2 : index
    %c0_5 = arith.constant 0 : index
    %4 = vector.load %arg3[%c0_4, %c2, %c0_5] : memref<1x5x128xf32, #tpu.memory_space<vmem>>, vector<1x1x128xf32>
    %5 = vector.shape_cast %4 : vector<1x1x128xf32> to vector<1x128xf32>
    %c0_6 = arith.constant 0 : index
    %c3 = arith.constant 3 : index
    %c0_7 = arith.constant 0 : index
    %6 = vector.load %arg3[%c0_6, %c3, %c0_7] : memref<1x5x128xf32, #tpu.memory_space<vmem>>, vector<1x1x128xf32>
    %7 = vector.shape_cast %6 : vector<1x1x128xf32> to vector<1x128xf32>
    %c0_8 = arith.constant 0 : index
    %c4 = arith.constant 4 : index
    %c0_9 = arith.constant 0 : index
    %8 = vector.load %arg3[%c0_8, %c4, %c0_9] : memref<1x5x128xf32, #tpu.memory_space<vmem>>, vector<1x1x128xf32>
    %9 = vector.shape_cast %8 : vector<1x1x128xf32> to vector<1x128xf32>
    %c0_10 = arith.constant 0 : index
    %c0_11 = arith.constant 0 : index
    %c0_12 = arith.constant 0 : index
    %10 = vector.load %arg2[%c0_10, %c0_11, %c0_12] : memref<1x8x128xf32, #tpu.memory_space<vmem>>, vector<1x8x128xf32>
    %11 = vector.shape_cast %10 : vector<1x8x128xf32> to vector<8x128xf32>
    %12 = vector.broadcast %1 : vector<1x128xf32> to vector<8x128xf32>
    %13 = arith.mulf %12, %11 : vector<8x128xf32>
    %14 = vector.broadcast %3 : vector<1x128xf32> to vector<8x128xf32>
    %15 = arith.addf %13, %14 : vector<8x128xf32>
    %cst = arith.constant 0.000000e+00 : f32
    %16 = vector.broadcast %cst : f32 to vector<8x128xf32>
    %17 = arith.maximumf %15, %16 : vector<8x128xf32>
    %c0_13 = arith.constant 0 : index
    %c0_14 = arith.constant 0 : index
    %c0_15 = arith.constant 0 : index
    %18 = vector.load %arg4[%c0_13, %c0_14, %c0_15] : memref<2x128x128xf32, #tpu.memory_space<vmem>>, vector<1x128x128xf32>
    %19 = vector.shape_cast %18 : vector<1x128x128xf32> to vector<128x128xf32>
    %cst_16 = arith.constant dense<0.000000e+00> : vector<8x128xf32>
    %20 = tpu.matmul %17, %19, %cst_16 {dimension_numbers = #tpu.dot_dimension_numbers<[1], [0], [0], [1], [0, 0, 1, 1], [], []>} : vector<8x128xf32>, vector<128x128xf32>, vector<8x128xf32> -> vector<8x128xf32>
    %21 = vector.broadcast %5 : vector<1x128xf32> to vector<8x128xf32>
    %22 = arith.mulf %21, %20 : vector<8x128xf32>
    %23 = vector.broadcast %7 : vector<1x128xf32> to vector<8x128xf32>
    %24 = arith.addf %22, %23 : vector<8x128xf32>
    %cst_17 = arith.constant 0.000000e+00 : f32
    %25 = vector.broadcast %cst_17 : f32 to vector<8x128xf32>
    %26 = arith.maximumf %24, %25 : vector<8x128xf32>
    %c1_18 = arith.constant 1 : index
    %c0_19 = arith.constant 0 : index
    %c0_20 = arith.constant 0 : index
    %27 = vector.load %arg4[%c1_18, %c0_19, %c0_20] : memref<2x128x128xf32, #tpu.memory_space<vmem>>, vector<1x128x128xf32>
    %28 = vector.shape_cast %27 : vector<1x128x128xf32> to vector<128x128xf32>
    %cst_21 = arith.constant dense<0.000000e+00> : vector<8x128xf32>
    %29 = tpu.matmul %26, %28, %cst_21 {dimension_numbers = #tpu.dot_dimension_numbers<[1], [0], [0], [1], [0, 0, 1, 1], [], []>} : vector<8x128xf32>, vector<128x128xf32>, vector<8x128xf32> -> vector<8x128xf32>
    %30 = vector.broadcast %9 : vector<1x128xf32> to vector<8x128xf32>
    %31 = arith.addf %29, %30 : vector<8x128xf32>
    %c0_22 = arith.constant 0 : index
    %c0_23 = arith.constant 0 : index
    %c0_24 = arith.constant 0 : index
    %32 = vector.load %arg2[%c0_22, %c0_23, %c0_24] : memref<1x8x128xf32, #tpu.memory_space<vmem>>, vector<1x8x128xf32>
    %33 = vector.shape_cast %32 : vector<1x8x128xf32> to vector<8x128xf32>
    %34 = vector.broadcast %1 : vector<1x128xf32> to vector<8x128xf32>
    %35 = arith.mulf %34, %33 : vector<8x128xf32>
    %36 = vector.broadcast %3 : vector<1x128xf32> to vector<8x128xf32>
    %37 = arith.addf %35, %36 : vector<8x128xf32>
    %38 = arith.addf %37, %31 : vector<8x128xf32>
    %c0_25 = arith.constant 0 : index
    %c0_26 = arith.constant 0 : index
    %c0_27 = arith.constant 0 : index
    %39 = vector.load %arg5[%c0_25, %c0_26, %c0_27] : memref<1x8x128xf32, #tpu.memory_space<vmem>>, vector<1x8x128xf32>
    %40 = vector.shape_cast %39 : vector<1x8x128xf32> to vector<8x128xf32>
    %41 = vector.shape_cast %38 : vector<8x128xf32> to vector<1x8x128xf32>
    tpu.vector_store %arg5[%c0_25, %c0_26, %c0_27], %41 {strides = array<i32>} : memref<1x8x128xf32, #tpu.memory_space<vmem>>, vector<1x8x128xf32>,
    return
  }
  func.func @transform_0(%arg0: i32, %arg1: i32) -> (i32, i32, i32) {
    %c0_i32 = arith.constant 0 : i32
    %c0_i32_0 = arith.constant 0 : i32
    return %arg0, %arg1, %c0_i32 : i32, i32, i32
  }
  func.func @transform_1(%arg0: i32, %arg1: i32) -> (i32, i32, i32) {
    %c0_i32 = arith.constant 0 : i32
    %c0_i32_0 = arith.constant 0 : i32
    %c0_i32_1 = arith.constant 0 : i32
    return %arg0, %c0_i32, %c0_i32_0 : i32, i32, i32
  }
  func.func @transform_2(%arg0: i32, %arg1: i32) -> (i32, i32, i32) {
    %c0_i32 = arith.constant 0 : i32
    %c0_i32_0 = arith.constant 0 : i32
    %c0_i32_1 = arith.constant 0 : i32
    %c0_i32_2 = arith.constant 0 : i32
    return %c0_i32, %c0_i32_0, %c0_i32_1 : i32, i32, i32
  }
  func.func @transform_3(%arg0: i32, %arg1: i32) -> (i32, i32, i32) {
    %c0_i32 = arith.constant 0 : i32
    %c0_i32_0 = arith.constant 0 : i32
    return %arg0, %arg1, %c0_i32 : i32, i32, i32
  }
}

</mosaic_0001>

<llo_original>
// kernel: tpu_custom_call.1
$region0: #{tpu_custom_call.1}
  #allocation0 [shape = 'u32[]', space=smem, size = 0x4, offset = 0x4, fixed_abs, tag = 'smem constant byte address 0x4 - core index']
  #allocation1 [shape = 'u32[144,128]{1,0:T(1,128)}', space=vmem, size = 0x12000, scoped, tag = 'internal scratch']
  %s0 = inlined_call_operand.vmem [shape: f32[2,8,128], index: 0, kind: input, shape index: {}]
  %s1 = inlined_call_operand.vmem [shape: f32[2,5,128], index: 1, kind: input, shape index: {}]
  %s2 = inlined_call_operand.hbm [shape: f32[2,128,128], index: 2, kind: input, shape index: {}]
  %s3 = inlined_call_operand.hbm [shape: f32[2,8,128], index: 3, kind: output, shape index: {}]
  %s4 = sld [smem:[#allocation0]]
  $region49: #{tpu_custom_call.1} parent=0
    _
  %s6 = ssub.s32 1, %s4
  %s7 = scalar_select 0, %s6, %s4
  $region1: #{tpu_custom_call.1} parent=0
    #allocation2 [shape = 'u8[131072]{0}', space=vmem, size = 0x20000, scoped, tag = 'input window, operand 2, single buffered']
    #allocation3 [shape = 's32[2]{0}', space=sflag, size = 0x8, scoped, tag = 'scoped memory for tpu_custom_call.1']
    #allocation4 [shape = 's32[2]{0}', space=sflag, size = 0x8, scoped, tag = 'scoped memory for tpu_custom_call.1']
    #allocation5 [shape = 'u8[8192]{0}', space=vmem, size = 0x2000, scoped, tag = 'output window, operand 0']
    %8 = vsyncpa [#allocation3], 0
    %9 = vsyncpa [#allocation4], 0
    %s10 = scalar_lea.sflag [#allocation4], 1
    %11 = vsyncpa %s10, 0
    loop: start=0, step=1, limit=4
    $region2: #{tpu_custom_call.1} parent=1 // loop_pre_header
      _
    $region3: #{tpu_custom_call.1} parent=1 // loop_header
      %s13 = sphi 0, %s17
      %p14 = scmp.ge.s32.totalorder %s13, 4
      %s20 = sphi 0, %s32
      %s21 = sphi 0, %s28
      %s22 = sphi 0, %s20
      %s23 = sphi 0, %s21
      %s24 = sphi 0, %s22
      %s25 = sphi 0, %s23
      %s37 = sphi 0, %s39
      %s40 = sphi 0, %s37
      %s41 = sphi 0, %s40
      %s57 = sphi 0, %s41
      %s63 = sphi 0, %s65
      %s66 = sphi 0, %s63
      %s67 = sphi 0, %s66
      %s83 = sphi 0, %s67
      %s87 = sphi 0, %s87
      %s89 = sphi 0, %s87
      %s90 = sphi 0, %s89
      %s104 = sphi 0, %s90
      %s112 = sphi 0, %s114
      %s115 = sphi 0, %s112
      %s116 = sphi 0, %s115
      %s132 = sphi 0, %s116
    $region4: #{tpu_custom_call.1} parent=1 // loop_header_branch
      %16 = sbr.rel (%p14) target = $region8
    $region5: #{tpu_custom_call.1} parent=1 // loop_body
      %s18 = ssub.s32 %s13, 1
      %s19 = ssub.s32 %s13, 2
      %s26 = sadd.s32 1, %s21
      %p27 = scmp.ge.s32.totalorder %s26, 1
      %s28 = scalar_select %p27, 0, %s26
      %s29 = sadd.s32 1, %s20
      %s30 = scalar_select %p27, %s29, %s20
      %p31 = scmp.ge.s32.totalorder %s30, 2
      %s32 = scalar_select %p31, 0, %s30
      %s33 = ssub.s32 %s20, %s32
      %s34 = ssub.s32 %s21, %s28
      %s35 = sor.u32 %s33, %s34
      %p36 = scmp.eq.s32.totalorder %s35, 0
      %s38 = sadd.s32 %s37, 1
      %s39 = scalar_select %p36, %s37, %s38
      %p42 = pneg %p36
      %p43 = scmp.eq.s32.totalorder %s13, 1
      %p44 = por %p42, %p43
      %p45 = scmp.ne.s32.totalorder %s37, %s40
      %p46 = scmp.eq.s32.totalorder %s13, 0
      %p47 = por %p45, %p46
      %p48 = scmp.ne.s32.totalorder %s37, %s40
      %p49 = scmp.eq.s32.totalorder %s18, 1
      %p50 = por %p48, %p49
      %p51 = scmp.ne.s32.totalorder %s40, %s41
      %p52 = scmp.eq.s32.totalorder %s18, 0
      %p53 = por %p51, %p52
      %p54 = scmp.ne.s32.totalorder %s40, %s41
      %p55 = scmp.eq.s32.totalorder %s19, 1
      %p56 = por %p54, %p55
      %p58 = scmp.ne.s32.totalorder %s41, %s57
      %p59 = scmp.eq.s32.totalorder %s19, 0
      %p60 = por %p58, %p59
      %s61 = ssub.s32 %s20, %s32
      %p62 = scmp.eq.s32.totalorder %s61, 0
      %s64 = sadd.s32 %s63, 1
      %s65 = scalar_select %p62, %s63, %s64
      %p68 = pneg %p62
      %p69 = scmp.eq.s32.totalorder %s13, 1
      %p70 = por %p68, %p69
      %p71 = scmp.ne.s32.totalorder %s63, %s66
      %p72 = scmp.eq.s32.totalorder %s13, 0
      %p73 = por %p71, %p72
      %p74 = scmp.ne.s32.totalorder %s63, %s66
      %p75 = scmp.eq.s32.totalorder %s18, 1
      %p76 = por %p74, %p75
      %p77 = scmp.ne.s32.totalorder %s66, %s67
      %p78 = scmp.eq.s32.totalorder %s18, 0
      %p79 = por %p77, %p78
      %p80 = scmp.ne.s32.totalorder %s66, %s67
      %p81 = scmp.eq.s32.totalorder %s19, 1
      %p82 = por %p80, %p81
      %p84 = scmp.ne.s32.totalorder %s67, %s83
      %p85 = scmp.eq.s32.totalorder %s19, 0
      %p86 = por %p84, %p85
      %s88 = sadd.s32 %s87, 1
      %p91 = scmp.eq.s32.totalorder %s13, 1
      %p92 = scmp.ne.s32.totalorder %s87, %s89
      %p93 = scmp.eq.s32.totalorder %s13, 0
      %p94 = por %p92, %p93
      %p95 = scmp.ne.s32.totalorder %s87, %s89
      %p96 = scmp.eq.s32.totalorder %s18, 1
      %p97 = por %p95, %p96
      %p98 = scmp.ne.s32.totalorder %s89, %s90
      %p99 = scmp.eq.s32.totalorder %s18, 0
      %p100 = por %p98, %p99
      %p101 = scmp.ne.s32.totalorder %s89, %s90
      %p102 = scmp.eq.s32.totalorder %s19, 1
      %p103 = por %p101, %p102
      %p105 = scmp.ne.s32.totalorder %s90, %s104
      %p106 = scmp.eq.s32.totalorder %s19, 0
      %p107 = por %p105, %p106
      %s108 = ssub.s32 %s20, %s32
      %s109 = ssub.s32 %s21, %s28
      %s110 = sor.u32 %s108, %s109
      %p111 = scmp.eq.s32.totalorder %s110, 0
      %s113 = sadd.s32 %s112, 1
      %s114 = scalar_select %p111, %s112, %s113
      %p117 = pneg %p111
      %p118 = scmp.eq.s32.totalorder %s13, 1
      %p119 = por %p117, %p118
      %p120 = scmp.ne.s32.totalorder %s112, %s115
      %p121 = scmp.eq.s32.totalorder %s13, 0
      %p122 = por %p120, %p121
      %p123 = scmp.ne.s32.totalorder %s112, %s115
      %p124 = scmp.eq.s32.totalorder %s18, 1
      %p125 = por %p123, %p124
      %p126 = scmp.ne.s32.totalorder %s115, %s116
      %p127 = scmp.eq.s32.totalorder %s18, 0
      %p128 = por %p126, %p127
      %p129 = scmp.ne.s32.totalorder %s115, %s116
      %p130 = scmp.eq.s32.totalorder %s19, 1
      %p131 = por %p129, %p130
      %p133 = scmp.ne.s32.totalorder %s116, %s132
      %p134 = scmp.eq.s32.totalorder %s19, 0
      %p135 = por %p133, %p134
      %p136 = scmp.le.s32.totalorder 1, %s13
      %p137 = scmp.lt.s32.totalorder %s13, 3
      %p138 = pnand %p136, %p137
      %p139 = pneg %p138
      // Predicated region
      $region9: #{tpu_custom_call.1} parent=5 // pred_check
        _
      $region10: #{tpu_custom_call.1} parent=5 // pred_check_branch
        %141 = sbr.rel (%p138) target = $region12
      $region11: #{tpu_custom_call.1} parent=5 // pred_region
        %s142 = ssub.s32 %s13, 1
        // Predicated region
        $region13: #{tpu_custom_call.1} parent=11 // pred_check
          %p143 = pneg %p100
        $region14: #{tpu_custom_call.1} parent=11 // pred_check_branch
          %145 = sbr.rel (%p143) target = $region16
        $region15: #{tpu_custom_call.1} parent=11 // pred_region
          %s147 = ssub.s32 4096, 4096
          %148 = vsyncadd [#allocation3], %s147
          %s149 = sshll.u32 [#allocation2], 4
          %s150 = int_to_ptr.vmem [resolvable:$true] %s149
          %155 = dma.hbm_to_vmem [thread:$0]  %s2, 4096, %s150, [#allocation3], 128, 128, 8
        $region16: #{tpu_custom_call.1} parent=11 // pred_fallthru
          _
      $region12: #{tpu_custom_call.1} parent=5 // pred_fallthru
        _
      %p156 = scmp.lt.s32.totalorder %s13, 2
      // Predicated region
      $region17: #{tpu_custom_call.1} parent=5 // pred_check
        %p157 = pneg %p156
      $region18: #{tpu_custom_call.1} parent=5 // pred_check_branch
        %159 = sbr.rel (%p157) target = $region20
      $region19: #{tpu_custom_call.1} parent=5 // pred_region
        // Predicated region
        $region21: #{tpu_custom_call.1} parent=19 // pred_check
          %p160 = pneg %p47
        $region22: #{tpu_custom_call.1} parent=19 // pred_check_branch
          %162 = sbr.rel (%p160) target = $region24
        $region23: #{tpu_custom_call.1} parent=19 // pred_region
          %p163 = scmp.lt.s32.totalorder %s20, 1
          %s164 = scalar_select %p163, %s20, 1
          %p165 = scmp.lt.s32.totalorder %s21, 0
          %s166 = scalar_select %p165, %s21, 0
          %s167 = sadd.s32 %s166, %s164
          %s168 = smul.addr %s167, 8
          %s169 = scalar_lea.vmem %s0, %s168
        $region24: #{tpu_custom_call.1} parent=19 // pred_fallthru
          _
        // Predicated region
        $region25: #{tpu_custom_call.1} parent=19 // pred_check
          %p170 = pneg %p73
        $region26: #{tpu_custom_call.1} parent=19 // pred_check_branch
          %172 = sbr.rel (%p170) target = $region28
        $region27: #{tpu_custom_call.1} parent=19 // pred_region
          %p173 = scmp.lt.s32.totalorder %s20, 1
          %s174 = scalar_select %p173, %s20, 1
          %s175 = smul.addr %s174, 8
          %s176 = scalar_lea.vmem %s1, %s175
        $region28: #{tpu_custom_call.1} parent=19 // pred_fallthru
          _
      $region20: #{tpu_custom_call.1} parent=5 // pred_fallthru
        _
      %p177 = scmp.le.s32.totalorder 1, %s13
      %p178 = scmp.lt.s32.totalorder %s13, 3
      %p179 = pnand %p177, %p178
      %p180 = pneg %p179
      // Predicated region
      $region29: #{tpu_custom_call.1} parent=5 // pred_check
        _
      $region30: #{tpu_custom_call.1} parent=5 // pred_check_branch
        %182 = sbr.rel (%p179) target = $region32
      $region31: #{tpu_custom_call.1} parent=5 // pred_region
        %s183 = ssub.s32 %s13, 1
        // Predicated region
        $region33: #{tpu_custom_call.1} parent=31 // pred_check
          %p184 = pneg %p100
        $region34: #{tpu_custom_call.1} parent=31 // pred_check_branch
          %186 = sbr.rel (%p184) target = $region36
        $region35: #{tpu_custom_call.1} parent=31 // pred_region
          %187 = dma.done [#allocation3], 4096
        $region36: #{tpu_custom_call.1} parent=31 // pred_fallthru
          _
        %p188 = scmp.lt.s32.totalorder %s22, 1
        %s189 = scalar_select %p188, %s22, 1
        %p190 = scmp.lt.s32.totalorder %s23, 0
        %s191 = scalar_select %p190, %s23, 0
        %s192 = sadd.s32 %s191, %s189
        %s193 = smul.addr %s192, 8
        %s194 = scalar_lea.vmem %s0, %s193
        %p195 = pneg %p53
        %p196 = pneg %p50
        %p197 = scmp.lt.s32.totalorder %s22, 1
        %s198 = scalar_select %p197, %s22, 1
        %s199 = smul.addr %s198, 8
        %s200 = scalar_lea.vmem %s1, %s199
        %p201 = pneg %p79
        %p202 = pneg %p76
        %p203 = pneg %p100
        %p204 = pneg %p97
        %p205 = pneg %p128
        %p206 = pneg %p125
        %s207 = sand.u32 %s115, 1
        %s208 = scalar_lea.sflag [#allocation4], %s207
        %s209 = sand.u32 %s115, 1
        %s210 = smul.addr %s209, 8
        %s211 = scalar_lea.vmem [#allocation5], %s210
        %p212 = scmp.lt.s32.totalorder %s22, 1
        %s213 = scalar_select %p212, %s22, 1
        %p214 = scmp.lt.s32.totalorder %s23, 0
        %s215 = scalar_select %p214, %s23, 0
        %s216 = sadd.s32 %s215, %s213
        %s217 = smul.addr %s216, 8
        %s218 = scalar_lea.vmem %s0, %s217
        %p219 = scmp.lt.s32.totalorder %s22, 1
        %s220 = scalar_select %p219, %s22, 1
        %s221 = smul.addr %s220, 8
        %s222 = scalar_lea.vmem %s1, %s221
        %v223 = vld [vmem:[%s222] sm:$0x1]
        %v224 = vld [vmem:[%s222 + $0x1] sm:$0x1]
        %v225 = vld [vmem:[%s222 + $0x2] sm:$0x1]
        %v226 = vld [vmem:[%s222 + $0x3] sm:$0x1]
        %v227 = vld [vmem:[%s222 + $0x4] sm:$0x1]
        %v228 = vld [vmem:[%s218] sm:$0xff]
        %v229 = vlaneseq
        %v230 = vshrl.u32 %v229, 7
        %v231 = vsub.s32 0, %v230
        %v232 = vrot.slane %v223, %v231
        %v233 = vmul.f32 %v232, %v228
        %v234 = vlaneseq
        %v235 = vshrl.u32 %v234, 7
        %v236 = vsub.s32 0, %v235
        %v237 = vrot.slane %v224, %v236
        %v238 = vadd.f32 %v233, %v237
        %v239 = vmax.f32 %v238, 0.0
        %v240 = vld [vmem:[#allocation2] sm:$0xff]
        %v241 = vld [vmem:[#allocation2 + $0x8] sm:$0xff]
        %v242 = vld [vmem:[#allocation2 + $0x10] sm:$0xff]
        %v243 = vld [vmem:[#allocation2 + $0x18] sm:$0xff]
        %v244 = vld [vmem:[#allocation2 + $0x20] sm:$0xff]
        %v245 = vld [vmem:[#allocation2 + $0x28] sm:$0xff]
        %v246 = vld [vmem:[#allocation2 + $0x30] sm:$0xff]
        %v247 = vld [vmem:[#allocation2 + $0x38] sm:$0xff]
        %v248 = vld [vmem:[#allocation2 + $0x40] sm:$0xff]
        %v249 = vld [vmem:[#allocation2 + $0x48] sm:$0xff]
        %v250 = vld [vmem:[#allocation2 + $0x50] sm:$0xff]
        %v251 = vld [vmem:[#allocation2 + $0x58] sm:$0xff]
        %v252 = vld [vmem:[#allocation2 + $0x60] sm:$0xff]
        %v253 = vld [vmem:[#allocation2 + $0x68] sm:$0xff]
        %v254 = vld [vmem:[#allocation2 + $0x70] sm:$0xff]
        %v255 = vld [vmem:[#allocation2 + $0x78] sm:$0xff]
        %256 = vmatprep.subr.mxu0 0.0
        %257 = vmatpush1.msra.mxu0 %v240
        %258 = vmatprep.subr.mxu0 0.0
        %259 = vmatpush1.msra.mxu0 %v241
        %260 = vmatprep.subr.mxu0 0.0
        %261 = vmatpush1.msra.mxu0 %v242
        %262 = vmatprep.subr.mxu0 0.0
        %263 = vmatpush1.msra.mxu0 %v243
        %264 = vmatprep.subr.mxu0 0.0
        %265 = vmatpush1.msra.mxu0 %v244
        %266 = vmatprep.subr.mxu0 0.0
        %267 = vmatpush1.msra.mxu0 %v245
        %268 = vmatprep.subr.mxu0 0.0
        %269 = vmatpush1.msra.mxu0 %v246
        %270 = vmatprep.subr.mxu0 0.0
        %271 = vmatpush1.msra.mxu0 %v247
        %272 = vmatprep.subr.mxu0 0.0
        %273 = vmatpush1.msra.mxu0 %v248
        %274 = vmatprep.subr.mxu0 0.0
        %275 = vmatpush1.msra.mxu0 %v249
        %276 = vmatprep.subr.mxu0 0.0
        %277 = vmatpush1.msra.mxu0 %v250
        %278 = vmatprep.subr.mxu0 0.0
        %279 = vmatpush1.msra.mxu0 %v251
        %280 = vmatprep.subr.mxu0 0.0
        %281 = vmatpush1.msra.mxu0 %v252
        %282 = vmatprep.subr.mxu0 0.0
        %283 = vmatpush1.msra.mxu0 %v253
        %284 = vmatprep.subr.mxu0 0.0
        %285 = vmatpush1.msra.mxu0 %v254
        %286 = vmatprep.subr.mxu0 0.0
        %287 = vmatpush1.msra.mxu0 %v255
        %288 = vmatprep.subr.mxu0 0.0
        %289 = vmatpush1.msra.mxu0 0.0
        %290 = vmatprep.subr.mxu0 0.0
        %291 = vmatpush1.msra.mxu0 0.0
        %292 = vmatprep.subr.mxu0 0.0
        %293 = vmatpush1.msra.mxu0 0.0
        %294 = vmatprep.subr.mxu0 0.0
        %295 = vmatpush1.msra.mxu0 0.0
        %296 = vmatprep.subr.mxu0 0.0
        %297 = vmatpush1.msra.mxu0 0.0
        %298 = vmatprep.subr.mxu0 0.0
        %299 = vmatpush1.msra.mxu0 0.0
        %300 = vmatprep.subr.mxu0 0.0
        %301 = vmatpush1.msra.mxu0 0.0
        %302 = vmatprep.subr.mxu0 0.0
        %303 = vmatpush1.msra.mxu0 0.0
        %304 = vmatprep.subr.mxu0 0.0
        %305 = vmatpush1.msra.mxu0 0.0
        %306 = vmatprep.subr.mxu0 0.0
        %307 = vmatpush1.msra.mxu0 0.0
        %308 = vmatprep.subr.mxu0 0.0
        %309 = vmatpush1.msra.mxu0 0.0
        %310 = vmatprep.subr.mxu0 0.0
        %311 = vmatpush1.msra.mxu0 0.0
        %312 = vmatprep.subr.mxu0 0.0
        %313 = vmatpush1.msra.mxu0 0.0
        %314 = vmatprep.subr.mxu0 0.0
        %315 = vmatpush1.msra.mxu0 0.0
        %316 = vmatprep.subr.mxu0 0.0
        %317 = vmatpush1.msra.mxu0 0.0
        %318 = vmatprep.subr.mxu0 0.0
        %319 = vmatpush1.msra.mxu0 0.0
        %320 = vmatprep.mubr.f32.mxu0 0.0
        %321 = vmatmul.mubr.f32.gmra.mrb[0].mxu0 %v239
        %v322 = vpop.f32.mrb[0].mxu0
        %v323 = vadd.f32 0.0, %v322
        %v324 = vpop.f32.mrb[0].mxu0
        %325 = vdwg.mxu0
        %v326 = vlaneseq
        %v327 = vshrl.u32 %v326, 7
        %v328 = vsub.s32 0, %v327
        %v329 = vrot.slane %v225, %v328
        %v330 = vmul.f32 %v329, %v323
        %v331 = vlaneseq
        %v332 = vshrl.u32 %v331, 7
        %v333 = vsub.s32 0, %v332
        %v334 = vrot.slane %v226, %v333
        %v335 = vadd.f32 %v330, %v334
        %v336 = vmax.f32 %v335, 0.0
        %s337 = scalar_lea.vmem [#allocation2], 128
        %v338 = vld [vmem:[%s337] sm:$0xff]
        %v339 = vld [vmem:[%s337 + $0x8] sm:$0xff]
        %v340 = vld [vmem:[%s337 + $0x10] sm:$0xff]
        %v341 = vld [vmem:[%s337 + $0x18] sm:$0xff]
        %v342 = vld [vmem:[%s337 + $0x20] sm:$0xff]
        %v343 = vld [vmem:[%s337 + $0x28] sm:$0xff]
        %v344 = vld [vmem:[%s337 + $0x30] sm:$0xff]
        %v345 = vld [vmem:[%s337 + $0x38] sm:$0xff]
        %v346 = vld [vmem:[%s337 + $0x40] sm:$0xff]
        %v347 = vld [vmem:[%s337 + $0x48] sm:$0xff]
        %v348 = vld [vmem:[%s337 + $0x50] sm:$0xff]
        %v349 = vld [vmem:[%s337 + $0x58] sm:$0xff]
        %v350 = vld [vmem:[%s337 + $0x60] sm:$0xff]
        %v351 = vld [vmem:[%s337 + $0x68] sm:$0xff]
        %v352 = vld [vmem:[%s337 + $0x70] sm:$0xff]
        %v353 = vld [vmem:[%s337 + $0x78] sm:$0xff]
        %v354 = vlaneseq
        %v355 = vshrl.u32 %v354, 7
        %v356 = vsub.s32 0, %v355
        %v357 = vrot.slane %v227, %v356
        %358 = vmatprep.subr.mxu0 0.0
        %359 = vmatpush1.msra.mxu0 %v338
        %360 = vmatprep.subr.mxu0 0.0
        %361 = vmatpush1.msra.mxu0 %v339
        %362 = vmatprep.subr.mxu0 0.0
        %363 = vmatpush1.msra.mxu0 %v340
        %364 = vmatprep.subr.mxu0 0.0
        %365 = vmatpush1.msra.mxu0 %v341
        %366 = vmatprep.subr.mxu0 0.0
        %367 = vmatpush1.msra.mxu0 %v342
        %368 = vmatprep.subr.mxu0 0.0
        %369 = vmatpush1.msra.mxu0 %v343
        %370 = vmatprep.subr.mxu0 0.0
        %371 = vmatpush1.msra.mxu0 %v344
        %372 = vmatprep.subr.mxu0 0.0
        %373 = vmatpush1.msra.mxu0 %v345
        %374 = vmatprep.subr.mxu0 0.0
        %375 = vmatpush1.msra.mxu0 %v346
        %376 = vmatprep.subr.mxu0 0.0
        %377 = vmatpush1.msra.mxu0 %v347
        %378 = vmatprep.subr.mxu0 0.0
        %379 = vmatpush1.msra.mxu0 %v348
        %380 = vmatprep.subr.mxu0 0.0
        %381 = vmatpush1.msra.mxu0 %v349
        %382 = vmatprep.subr.mxu0 0.0
        %383 = vmatpush1.msra.mxu0 %v350
        %384 = vmatprep.subr.mxu0 0.0
        %385 = vmatpush1.msra.mxu0 %v351
        %386 = vmatprep.subr.mxu0 0.0
        %387 = vmatpush1.msra.mxu0 %v352
        %388 = vmatprep.subr.mxu0 0.0
        %389 = vmatpush1.msra.mxu0 %v353
        %390 = vmatprep.subr.mxu0 0.0
        %391 = vmatpush1.msra.mxu0 0.0
        %392 = vmatprep.subr.mxu0 0.0
        %393 = vmatpush1.msra.mxu0 0.0
        %394 = vmatprep.subr.mxu0 0.0
        %395 = vmatpush1.msra.mxu0 0.0
        %396 = vmatprep.subr.mxu0 0.0
        %397 = vmatpush1.msra.mxu0 0.0
        %398 = vmatprep.subr.mxu0 0.0
        %399 = vmatpush1.msra.mxu0 0.0
        %400 = vmatprep.subr.mxu0 0.0
        %401 = vmatpush1.msra.mxu0 0.0
        %402 = vmatprep.subr.mxu0 0.0
        %403 = vmatpush1.msra.mxu0 0.0
        %404 = vmatprep.subr.mxu0 0.0
        %405 = vmatpush1.msra.mxu0 0.0
        %406 = vmatprep.subr.mxu0 0.0
        %407 = vmatpush1.msra.mxu0 0.0
        %408 = vmatprep.subr.mxu0 0.0
        %409 = vmatpush1.msra.mxu0 0.0
        %410 = vmatprep.subr.mxu0 0.0
        %411 = vmatpush1.msra.mxu0 0.0
        %412 = vmatprep.subr.mxu0 0.0
        %413 = vmatpush1.msra.mxu0 0.0
        %414 = vmatprep.subr.mxu0 0.0
        %415 = vmatpush1.msra.mxu0 0.0
        %416 = vmatprep.subr.mxu0 0.0
        %417 = vmatpush1.msra.mxu0 0.0
        %418 = vmatprep.subr.mxu0 0.0
        %419 = vmatpush1.msra.mxu0 0.0
        %420 = vmatprep.subr.mxu0 0.0
        %421 = vmatpush1.msra.mxu0 0.0
        %422 = vmatprep.mubr.f32.mxu0 0.0
        %423 = vmatmul.mubr.f32.gmra.mrb[0].mxu0 %v336
        %v424 = vpop.f32.mrb[0].mxu0
        %v425 = vadd.f32 %v357, %v424
        %v426 = vpop.f32.mrb[0].mxu0
        %427 = vdwg.mxu0
        %v428 = vadd.f32 %v238, %v425
        %429 = vst [vmem:[%s211] sm:$0xff] %v428
        %s430 = sand.u32 %s115, 1
        %s431 = scalar_lea.sflag [#allocation4], %s430
        %s432 = sand.u32 %s115, 1
        %s433 = smul.addr %s432, 8
        %s434 = scalar_lea.vmem [#allocation5], %s433
        // Predicated region
        $region37: #{tpu_custom_call.1} parent=31 // pred_check
          %p435 = pneg %p125
        $region38: #{tpu_custom_call.1} parent=31 // pred_check_branch
          %437 = sbr.rel (%p435) target = $region40
        $region39: #{tpu_custom_call.1} parent=31 // pred_region
          %s439 = ssub.s32 128, 128
          %440 = vsyncadd %s431, %s439
          %s441 = sadd.s32 %s23, %s22
          %s442 = smul.addr %s441, 128
          %s443 = scalar_lea.hbm %s3, %s442
          %s445 = sshll.u32 %s434, 4
          %s446 = int_to_ptr.vmem [resolvable:$true] %s445
          %448 = dma.vmem_to_hbm [thread:$0]  %s446, 128, %s443, %s431
        $region40: #{tpu_custom_call.1} parent=31 // pred_fallthru
          _
      $region32: #{tpu_custom_call.1} parent=5 // pred_fallthru
        _
      %p449 = scmp.le.s32.totalorder 2, %s13
      // Predicated region
      $region41: #{tpu_custom_call.1} parent=5 // pred_check
        %p450 = pneg %p449
      $region42: #{tpu_custom_call.1} parent=5 // pred_check_branch
        %452 = sbr.rel (%p450) target = $region44
      $region43: #{tpu_custom_call.1} parent=5 // pred_region
        %s453 = ssub.s32 %s13, 2
        // Predicated region
        $region45: #{tpu_custom_call.1} parent=43 // pred_check
          %p454 = pneg %p131
        $region46: #{tpu_custom_call.1} parent=43 // pred_check_branch
          %456 = sbr.rel (%p454) target = $region48
        $region47: #{tpu_custom_call.1} parent=43 // pred_region
          %s457 = sand.u32 %s116, 1
          %s458 = scalar_lea.sflag [#allocation4], %s457
          %s459 = sand.u32 %s116, 1
          %s460 = smul.addr %s459, 8
          %s461 = scalar_lea.vmem [#allocation5], %s460
          %462 = dma.done %s458, 128
        $region48: #{tpu_custom_call.1} parent=43 // pred_fallthru
          _
      $region44: #{tpu_custom_call.1} parent=5 // pred_fallthru
        _
    $region6: #{tpu_custom_call.1} parent=1 // loop_footer
      %s17 = sadd.s32 1, %s13
    $region7: #{tpu_custom_call.1} parent=1 // loop_footer_branch
      %12 = sbr.rel target = $region3
    $region8: #{tpu_custom_call.1} parent=1 // loop_exit
      _
    %463 = vsyncpa [#allocation3], 1
    %s464 = scalar_lea.sflag [#allocation3], 1
    %465 = vsyncpa %s464, 1
    %466 = vsyncpa [#allocation4], 1
    %s467 = scalar_lea.sflag [#allocation4], 1
    %468 = vsyncpa %s467, 1

</llo_original>
